<compile_context>
chip_gen: v7x
topology: tpu7x:2x2x1
jax: 0.10.0
libtpu: 0.0.40
codegen_flags: <defaults>
</compile_context>

<pallas_src>
import functools

import jax
import jax.numpy as jnp
from jax.experimental import pallas as pl
from jax.experimental.pallas import tpu as pltpu

_EPS = 1e-5


def _basic_block_kernel(x_ref, bw1_ref, bw2_ref, g1_ref, b1_ref, g2_ref,
                        b2_ref, out_ref, *, H, C, inv_m):
    """Whole BasicBlock, fully resident in VMEM, lane-dense (N*H, W*C) view.

    x_ref    : (N*H, W*C)        input, lane-dense
    bw*_ref  : (3*W*C, W*C)      stacked block-banded conv weights
                                 (rows: [kernel-row 0; 1; 2])
    g*/b*    : (1, W*C)          BN gamma/beta, pre-broadcast over W
    out_ref  : (N*H, W*C)
    """
    NH, WC = x_ref.shape
    x = x_ref[...]

    # Per-row validity masks for the +/-1 H shifts (zero-padding at h==0 /
    # h==H-1, which also kills leakage across images in the N*H stacking).
    h = jax.lax.broadcasted_iota(jnp.int32, (NH, 1), 0) % H
    mask_up = (h > 0).astype(jnp.float32)          # row-1 exists
    mask_dn = (h < H - 1).astype(jnp.float32)      # row+1 exists

    def conv3x3(v, bw_ref):
        # H taps via sublane roll + mask (XLU/VPU), W taps / W padding live
        # inside the band structure of bw; one fused K=3*W*C MXU matmul.
        vm = pltpu.roll(v, shift=1, axis=0) * mask_up        # v[row-1]
        vp = pltpu.roll(v, shift=NH - 1, axis=0) * mask_dn   # v[row+1]
        big = jnp.concatenate([vm, v, vp], axis=1)           # (NH, 3*WC)
        return jnp.dot(big, bw_ref[...], preferred_element_type=jnp.float32)

    def lane_channel_sum(s):
        # Circular rotate-and-add tree over the lane axis: sums the W
        # replications of each channel and leaves the per-channel result
        # replicated across all W positions.  Requires W to be a power of 2.
        t = s
        shift = C
        while shift < WC:
            t = t + pltpu.roll(t, shift=shift, axis=1)
            shift *= 2
        return t

    def batchnorm(acc, g, b):
        # Training-mode batch stats (biased variance), folded scale/shift.
        mean = lane_channel_sum(jnp.sum(acc, axis=0, keepdims=True)) * inv_m
        centered = acc - mean
        ss = jnp.sum(centered * centered, axis=0, keepdims=True)
        var = lane_channel_sum(ss) * inv_m
        scale = g * jax.lax.rsqrt(var + _EPS)
        return centered * scale + b

    y = jnp.maximum(
        batchnorm(conv3x3(x, bw1_ref), g1_ref[...], b1_ref[...]), 0.0)
    z = batchnorm(conv3x3(y, bw2_ref), g2_ref[...], b2_ref[...])
    out_ref[...] = jnp.maximum(z + x, 0.0)                    # residual + relu


def _band_weights(w_hwio, W):
    """(3,3,Ci,Co) HWIO -> (3*W*Ci, W*Co) stacked block-banded weight."""
    KH, KW, C, CO = w_hwio.shape
    wi = jnp.arange(W)[:, None]
    wo = jnp.arange(W)[None, :]
    big = jnp.zeros((KH, W, C, W, CO), jnp.float32)
    for dw in range(KW):
        sel = (wi == wo + dw - 1).astype(jnp.float32)          # (W, W)
        big = big + sel[None, :, None, :, None] * w_hwio[:, dw][:, None, :, None, :]
    return big.reshape(KH * W * C, W * CO)


def prepare_params(w1, g1, b1, w2, g2, b2, W):
    """One-time (per weight update) host-side prep; NOT in the per-call path."""
    C = w1.shape[2]
    assert W & (W - 1) == 0, "rotate-add BN tree requires W to be a power of 2"
    bw1 = _band_weights(w1, W)
    bw2 = _band_weights(w2, W)
    g1l = jnp.tile(g1, W).reshape(1, W * C)
    b1l = jnp.tile(b1, W).reshape(1, W * C)
    g2l = jnp.tile(g2, W).reshape(1, W * C)
    b2l = jnp.tile(b2, W).reshape(1, W * C)
    return bw1, bw2, g1l, b1l, g2l, b2l


@jax.jit
def basic_block(x_nhwc, bw1, bw2, g1l, b1l, g2l, b2l):
    """x_nhwc: (N,H,W,C) f32; bw*: (3*W*C, W*C); g*/b*: (1, W*C)."""
    N, H, W, C = x_nhwc.shape
    NH, WC = N * H, W * C
    x2d = x_nhwc.reshape(NH, WC)

    vmem = pl.BlockSpec(memory_space=pltpu.MemorySpace.VMEM)
    kernel = functools.partial(_basic_block_kernel, H=H, C=C,
                               inv_m=1.0 / (N * H * W))
    out2d = pl.pallas_call(
        kernel,
        out_shape=jax.ShapeDtypeStruct((NH, WC), jnp.float32),
        in_specs=[vmem] * 7,
        out_specs=vmem,
        compiler_params=pltpu.CompilerParams(vmem_limit_bytes=64 << 20),
    )(x2d, bw1, bw2, g1l, b1l, g2l, b2l)
    return out2d.reshape(N, H, W, C)


def _reference(x_nhwc, w1, g1, b1, w2, g2, b2):
    """Pure-JAX reference (training-mode BN), for correctness checking."""
    def conv(x, w):
        return jax.lax.conv_general_dilated(
            x, w, window_strides=(1, 1), padding="SAME",
            dimension_numbers=("NHWC", "HWIO", "NHWC"))

    def bn(x, g, b):
        m = jnp.mean(x, axis=(0, 1, 2), keepdims=True)
        v = jnp.mean((x - m) ** 2, axis=(0, 1, 2), keepdims=True)
        return (x - m) * jax.lax.rsqrt(v + _EPS) * g + b

    y = jax.nn.relu(bn(conv(x_nhwc, w1), g1, b1))
    z = bn(conv(y, w2), g2, b2)
    return jax.nn.relu(z + x_nhwc)


if __name__ == "__main__":
    # BasicBlock(inplanes=8, planes=8, stride=1, downsample=None)
    N, C, H, W = 2, 8, 16, 16

    key = jax.random.PRNGKey(0)
    kx, k1, k2, kg1, kb1, kg2, kb2 = jax.random.split(key, 7)

    # Input in the module's native NCHW, then moved to NHWC for the kernel.
    x_nchw = jax.random.normal(kx, (N, C, H, W), jnp.float32)
    x_nhwc = jnp.transpose(x_nchw, (0, 2, 3, 1))

    # conv weights: PyTorch OIHW (Cout, Cin, 3, 3), kaiming-style scale,
    # converted to HWIO for the NHWC kernel.
    fan_in = C * 3 * 3
    w1_oihw = jax.random.normal(k1, (C, C, 3, 3), jnp.float32) * (2.0 / fan_in) ** 0.5
    w2_oihw = jax.random.normal(k2, (C, C, 3, 3), jnp.float32) * (2.0 / fan_in) ** 0.5
    w1 = jnp.transpose(w1_oihw, (2, 3, 1, 0))
    w2 = jnp.transpose(w2_oihw, (2, 3, 1, 0))

    # BN affine params (perturbed so the affine path is exercised).
    g1 = 1.0 + 0.1 * jax.random.normal(kg1, (C,), jnp.float32)
    b1 = 0.1 * jax.random.normal(kb1, (C,), jnp.float32)
    g2 = 1.0 + 0.1 * jax.random.normal(kg2, (C,), jnp.float32)
    b2 = 0.1 * jax.random.normal(kb2, (C,), jnp.float32)

    # One-time parameter prep (hoisted out of the per-call path).
    bw1, bw2, g1l, b1l, g2l, b2l = prepare_params(w1, g1, b1, w2, g2, b2, W)

    out = jax.block_until_ready(
        basic_block(x_nhwc, bw1, bw2, g1l, b1l, g2l, b2l))
    ref = jax.block_until_ready(_reference(x_nhwc, w1, g1, b1, w2, g2, b2))

    assert out.shape == (N, H, W, C)
    err = float(jnp.max(jnp.abs(out - ref)))
    assert jnp.allclose(out, ref, rtol=1e-3, atol=1e-3), err

    print("KERNEL_OK")
</pallas_src>

<mosaic_0001>
module attributes {stable_mosaic.version = 11 : i64} {
  func.func @_basic_block_kernel(%arg0: memref<32x128xf32, #tpu.memory_space<vmem>>, %arg1: memref<384x128xf32, #tpu.memory_space<vmem>>, %arg2: memref<384x128xf32, #tpu.memory_space<vmem>>, %arg3: memref<1x128xf32, #tpu.memory_space<vmem>>, %arg4: memref<1x128xf32, #tpu.memory_space<vmem>>, %arg5: memref<1x128xf32, #tpu.memory_space<vmem>>, %arg6: memref<1x128xf32, #tpu.memory_space<vmem>>, %arg7: memref<32x128xf32, #tpu.memory_space<vmem>>) attributes {dimension_semantics = [], scalar_prefetch = 0 : i64, scratch_operands = 0 : i64, tpu.core_type = #tpu.core_type<tc>} {
    %c0 = arith.constant 0 : index
    %c0_0 = arith.constant 0 : index
    %0 = vector.load %arg0[%c0, %c0_0] : memref<32x128xf32, #tpu.memory_space<vmem>>, vector<32x128xf32>
    %1 = tpu.iota {dimensions = array<i32: 0>} : vector<32x1xi32>
    %c16_i32 = arith.constant 16 : i32
    %c0_i32 = arith.constant 0 : i32
    %2 = arith.cmpi eq, %c16_i32, %c0_i32 : i32
    %c1_i32 = arith.constant 1 : i32
    %3 = arith.select %2, %c1_i32, %c16_i32 : i32
    %4 = vector.broadcast %3 : i32 to vector<32x1xi32>
    %5 = arith.remsi %1, %4 : vector<32x1xi32>
    %c0_i32_1 = arith.constant 0 : i32
    %6 = vector.broadcast %c0_i32_1 : i32 to vector<32x1xi32>
    %7 = arith.cmpi ne, %5, %6 : vector<32x1xi32>
    %c0_i32_2 = arith.constant 0 : i32
    %8 = vector.broadcast %c0_i32_2 : i32 to vector<32x1xi32>
    %9 = arith.cmpi slt, %5, %8 : vector<32x1xi32>
    %c0_i32_3 = arith.constant 0 : i32
    %10 = arith.cmpi slt, %3, %c0_i32_3 : i32
    %11 = vector.broadcast %10 : i1 to vector<32x1xi1>
    %12 = vector.broadcast %11 : vector<32x1xi1> to vector<32x1xi1>
    %13 = arith.xori %9, %12 : vector<32x1xi1>
    %14 = arith.andi %13, %7 : vector<32x1xi1>
    %15 = vector.broadcast %3 : i32 to vector<32x1xi32>
    %16 = arith.addi %5, %15 : vector<32x1xi32>
    %17 = arith.select %14, %16, %5 : vector<32x1xi1>, vector<32x1xi32>
    %c0_i32_4 = arith.constant 0 : i32
    %18 = vector.broadcast %c0_i32_4 : i32 to vector<32x1xi32>
    %19 = arith.cmpi sgt, %17, %18 : vector<32x1xi32>
    %20 = arith.extui %19 : vector<32x1xi1> to vector<32x1xi32>
    %21 = arith.sitofp %20 : vector<32x1xi32> to vector<32x1xf32>
    %c15_i32 = arith.constant 15 : i32
    %22 = vector.broadcast %c15_i32 : i32 to vector<32x1xi32>
    %23 = arith.cmpi slt, %17, %22 : vector<32x1xi32>
    %24 = arith.extui %23 : vector<32x1xi1> to vector<32x1xi32>
    %25 = arith.sitofp %24 : vector<32x1xi32> to vector<32x1xf32>
    %c1_i32_5 = arith.constant 1 : i32
    %26 = tpu.dynamic_rotate %0 by %c1_i32_5 dim 0 : vector<32x128xf32>, i32 -> vector<32x128xf32>
    %27 = vector.broadcast %21 : vector<32x1xf32> to vector<32x128xf32>
    %28 = arith.mulf %26, %27 : vector<32x128xf32>
    %c31_i32 = arith.constant 31 : i32
    %29 = tpu.dynamic_rotate %0 by %c31_i32 dim 0 : vector<32x128xf32>, i32 -> vector<32x128xf32>
    %30 = vector.broadcast %25 : vector<32x1xf32> to vector<32x128xf32>
    %31 = arith.mulf %29, %30 : vector<32x128xf32>
    %32 = tpu.concatenate %28, %0, %31 in 1 : vector<32x128xf32>, vector<32x128xf32>, vector<32x128xf32> -> vector<32x384xf32>
    %c0_6 = arith.constant 0 : index
    %c0_7 = arith.constant 0 : index
    %33 = vector.load %arg1[%c0_6, %c0_7] : memref<384x128xf32, #tpu.memory_space<vmem>>, vector<384x128xf32>
    %cst = arith.constant dense<0.000000e+00> : vector<32x128xf32>
    %34 = tpu.matmul %32, %33, %cst {dimension_numbers = #tpu.dot_dimension_numbers<[1], [0], [0], [1], [0, 0, 1, 1], [], []>} : vector<32x384xf32>, vector<384x128xf32>, vector<32x128xf32> -> vector<32x128xf32>
    %c0_8 = arith.constant 0 : index
    %c0_9 = arith.constant 0 : index
    %35 = vector.load %arg3[%c0_8, %c0_9] : memref<1x128xf32, #tpu.memory_space<vmem>>, vector<1x128xf32>
    %c0_10 = arith.constant 0 : index
    %c0_11 = arith.constant 0 : index
    %36 = vector.load %arg4[%c0_10, %c0_11] : memref<1x128xf32, #tpu.memory_space<vmem>>, vector<1x128xf32>
    %cst_12 = arith.constant dense<0.000000e+00> : vector<128xf32>
    %37 = vector.multi_reduction <add>, %34, %cst_12 [0] : vector<32x128xf32> to vector<128xf32>
    %38 = vector.shape_cast %37 : vector<128xf32> to vector<1x128xf32>
    %c8_i32 = arith.constant 8 : i32
    %39 = tpu.dynamic_rotate %38 by %c8_i32 dim 1 : vector<1x128xf32>, i32 -> vector<1x128xf32>
    %40 = arith.addf %38, %39 : vector<1x128xf32>
    %c16_i32_13 = arith.constant 16 : i32
    %41 = tpu.dynamic_rotate %40 by %c16_i32_13 dim 1 : vector<1x128xf32>, i32 -> vector<1x128xf32>
    %42 = arith.addf %40, %41 : vector<1x128xf32>
    %c32_i32 = arith.constant 32 : i32
    %43 = tpu.dynamic_rotate %42 by %c32_i32 dim 1 : vector<1x128xf32>, i32 -> vector<1x128xf32>
    %44 = arith.addf %42, %43 : vector<1x128xf32>
    %c64_i32 = arith.constant 64 : i32
    %45 = tpu.dynamic_rotate %44 by %c64_i32 dim 1 : vector<1x128xf32>, i32 -> vector<1x128xf32>
    %46 = arith.addf %44, %45 : vector<1x128xf32>
    %cst_14 = arith.constant 0.001953125 : f32
    %47 = vector.broadcast %cst_14 : f32 to vector<1x128xf32>
    %48 = arith.mulf %46, %47 : vector<1x128xf32>
    %49 = vector.broadcast %48 : vector<1x128xf32> to vector<32x128xf32>
    %50 = arith.subf %34, %49 : vector<32x128xf32>
    %51 = arith.mulf %50, %50 : vector<32x128xf32>
    %cst_15 = arith.constant dense<0.000000e+00> : vector<128xf32>
    %52 = vector.multi_reduction <add>, %51, %cst_15 [0] : vector<32x128xf32> to vector<128xf32>
    %53 = vector.shape_cast %52 : vector<128xf32> to vector<1x128xf32>
    %c8_i32_16 = arith.constant 8 : i32
    %54 = tpu.dynamic_rotate %53 by %c8_i32_16 dim 1 : vector<1x128xf32>, i32 -> vector<1x128xf32>
    %55 = arith.addf %53, %54 : vector<1x128xf32>
    %c16_i32_17 = arith.constant 16 : i32
    %56 = tpu.dynamic_rotate %55 by %c16_i32_17 dim 1 : vector<1x128xf32>, i32 -> vector<1x128xf32>
    %57 = arith.addf %55, %56 : vector<1x128xf32>
    %c32_i32_18 = arith.constant 32 : i32
    %58 = tpu.dynamic_rotate %57 by %c32_i32_18 dim 1 : vector<1x128xf32>, i32 -> vector<1x128xf32>
    %59 = arith.addf %57, %58 : vector<1x128xf32>
    %c64_i32_19 = arith.constant 64 : i32
    %60 = tpu.dynamic_rotate %59 by %c64_i32_19 dim 1 : vector<1x128xf32>, i32 -> vector<1x128xf32>
    %61 = arith.addf %59, %60 : vector<1x128xf32>
    %cst_20 = arith.constant 0.001953125 : f32
    %62 = vector.broadcast %cst_20 : f32 to vector<1x128xf32>
    %63 = arith.mulf %61, %62 : vector<1x128xf32>
    %cst_21 = arith.constant 9.99999974E-6 : f32
    %64 = vector.broadcast %cst_21 : f32 to vector<1x128xf32>
    %65 = arith.addf %63, %64 : vector<1x128xf32>
    %66 = math.rsqrt %65 : vector<1x128xf32>
    %67 = arith.mulf %35, %66 : vector<1x128xf32>
    %68 = vector.broadcast %67 : vector<1x128xf32> to vector<32x128xf32>
    %69 = arith.mulf %50, %68 : vector<32x128xf32>
    %70 = vector.broadcast %36 : vector<1x128xf32> to vector<32x128xf32>
    %71 = arith.addf %69, %70 : vector<32x128xf32>
    %cst_22 = arith.constant 0.000000e+00 : f32
    %72 = vector.broadcast %cst_22 : f32 to vector<32x128xf32>
    %73 = arith.maximumf %71, %72 : vector<32x128xf32>
    %c1_i32_23 = arith.constant 1 : i32
    %74 = tpu.dynamic_rotate %73 by %c1_i32_23 dim 0 : vector<32x128xf32>, i32 -> vector<32x128xf32>
    %75 = vector.broadcast %21 : vector<32x1xf32> to vector<32x128xf32>
    %76 = arith.mulf %74, %75 : vector<32x128xf32>
    %c31_i32_24 = arith.constant 31 : i32
    %77 = tpu.dynamic_rotate %73 by %c31_i32_24 dim 0 : vector<32x128xf32>, i32 -> vector<32x128xf32>
    %78 = vector.broadcast %25 : vector<32x1xf32> to vector<32x128xf32>
    %79 = arith.mulf %77, %78 : vector<32x128xf32>
    %80 = tpu.concatenate %76, %73, %79 in 1 : vector<32x128xf32>, vector<32x128xf32>, vector<32x128xf32> -> vector<32x384xf32>
    %c0_25 = arith.constant 0 : index
    %c0_26 = arith.constant 0 : index
    %81 = vector.load %arg2[%c0_25, %c0_26] : memref<384x128xf32, #tpu.memory_space<vmem>>, vector<384x128xf32>
    %cst_27 = arith.constant dense<0.000000e+00> : vector<32x128xf32>
    %82 = tpu.matmul %80, %81, %cst_27 {dimension_numbers = #tpu.dot_dimension_numbers<[1], [0], [0], [1], [0, 0, 1, 1], [], []>} : vector<32x384xf32>, vector<384x128xf32>, vector<32x128xf32> -> vector<32x128xf32>
    %c0_28 = arith.constant 0 : index
    %c0_29 = arith.constant 0 : index
    %83 = vector.load %arg5[%c0_28, %c0_29] : memref<1x128xf32, #tpu.memory_space<vmem>>, vector<1x128xf32>
    %c0_30 = arith.constant 0 : index
    %c0_31 = arith.constant 0 : index
    %84 = vector.load %arg6[%c0_30, %c0_31] : memref<1x128xf32, #tpu.memory_space<vmem>>, vector<1x128xf32>
    %cst_32 = arith.constant dense<0.000000e+00> : vector<128xf32>
    %85 = vector.multi_reduction <add>, %82, %cst_32 [0] : vector<32x128xf32> to vector<128xf32>
    %86 = vector.shape_cast %85 : vector<128xf32> to vector<1x128xf32>
    %c8_i32_33 = arith.constant 8 : i32
    %87 = tpu.dynamic_rotate %86 by %c8_i32_33 dim 1 : vector<1x128xf32>, i32 -> vector<1x128xf32>
    %88 = arith.addf %86, %87 : vector<1x128xf32>
    %c16_i32_34 = arith.constant 16 : i32
    %89 = tpu.dynamic_rotate %88 by %c16_i32_34 dim 1 : vector<1x128xf32>, i32 -> vector<1x128xf32>
    %90 = arith.addf %88, %89 : vector<1x128xf32>
    %c32_i32_35 = arith.constant 32 : i32
    %91 = tpu.dynamic_rotate %90 by %c32_i32_35 dim 1 : vector<1x128xf32>, i32 -> vector<1x128xf32>
    %92 = arith.addf %90, %91 : vector<1x128xf32>
    %c64_i32_36 = arith.constant 64 : i32
    %93 = tpu.dynamic_rotate %92 by %c64_i32_36 dim 1 : vector<1x128xf32>, i32 -> vector<1x128xf32>
    %94 = arith.addf %92, %93 : vector<1x128xf32>
    %cst_37 = arith.constant 0.001953125 : f32
    %95 = vector.broadcast %cst_37 : f32 to vector<1x128xf32>
    %96 = arith.mulf %94, %95 : vector<1x128xf32>
    %97 = vector.broadcast %96 : vector<1x128xf32> to vector<32x128xf32>
    %98 = arith.subf %82, %97 : vector<32x128xf32>
    %99 = arith.mulf %98, %98 : vector<32x128xf32>
    %cst_38 = arith.constant dense<0.000000e+00> : vector<128xf32>
    %100 = vector.multi_reduction <add>, %99, %cst_38 [0] : vector<32x128xf32> to vector<128xf32>
    %101 = vector.shape_cast %100 : vector<128xf32> to vector<1x128xf32>
    %c8_i32_39 = arith.constant 8 : i32
    %102 = tpu.dynamic_rotate %101 by %c8_i32_39 dim 1 : vector<1x128xf32>, i32 -> vector<1x128xf32>
    %103 = arith.addf %101, %102 : vector<1x128xf32>
    %c16_i32_40 = arith.constant 16 : i32
    %104 = tpu.dynamic_rotate %103 by %c16_i32_40 dim 1 : vector<1x128xf32>, i32 -> vector<1x128xf32>
    %105 = arith.addf %103, %104 : vector<1x128xf32>
    %c32_i32_41 = arith.constant 32 : i32
    %106 = tpu.dynamic_rotate %105 by %c32_i32_41 dim 1 : vector<1x128xf32>, i32 -> vector<1x128xf32>
    %107 = arith.addf %105, %106 : vector<1x128xf32>
    %c64_i32_42 = arith.constant 64 : i32
    %108 = tpu.dynamic_rotate %107 by %c64_i32_42 dim 1 : vector<1x128xf32>, i32 -> vector<1x128xf32>
    %109 = arith.addf %107, %108 : vector<1x128xf32>
    %cst_43 = arith.constant 0.001953125 : f32
    %110 = vector.broadcast %cst_43 : f32 to vector<1x128xf32>
    %111 = arith.mulf %109, %110 : vector<1x128xf32>
    %cst_44 = arith.constant 9.99999974E-6 : f32
    %112 = vector.broadcast %cst_44 : f32 to vector<1x128xf32>
    %113 = arith.addf %111, %112 : vector<1x128xf32>
    %114 = math.rsqrt %113 : vector<1x128xf32>
    %115 = arith.mulf %83, %114 : vector<1x128xf32>
    %116 = vector.broadcast %115 : vector<1x128xf32> to vector<32x128xf32>
    %117 = arith.mulf %98, %116 : vector<32x128xf32>
    %118 = vector.broadcast %84 : vector<1x128xf32> to vector<32x128xf32>
    %119 = arith.addf %117, %118 : vector<32x128xf32>
    %120 = arith.addf %119, %0 : vector<32x128xf32>
    %cst_45 = arith.constant 0.000000e+00 : f32
    %121 = vector.broadcast %cst_45 : f32 to vector<32x128xf32>
    %122 = arith.maximumf %120, %121 : vector<32x128xf32>
    %c0_46 = arith.constant 0 : index
    %c0_47 = arith.constant 0 : index
    %123 = vector.load %arg7[%c0_46, %c0_47] : memref<32x128xf32, #tpu.memory_space<vmem>>, vector<32x128xf32>
    tpu.vector_store %arg7[%c0_46, %c0_47], %122 {strides = array<i32>} : memref<32x128xf32, #tpu.memory_space<vmem>>, vector<32x128xf32>,
    return
  }
}

</mosaic_0001>

<llo_original>
// kernel: basic_block.1
$region0: #{basic_block.1}
  #allocation0 [shape = 'u32[]', space=smem, size = 0x4, offset = 0x4, fixed_abs, tag = 'smem constant byte address 0x4 - core index']
  #allocation1 [shape = 'u32[144,128]{1,0:T(1,128)}', space=vmem, size = 0x12000, scoped, tag = 'internal scratch']
  %s0 = inlined_call_operand.hbm [shape: f32[32,128], index: 0, kind: input, shape index: {}]
  %s1 = inlined_call_operand.hbm [shape: f32[384,128], index: 1, kind: input, shape index: {}]
  %s2 = inlined_call_operand.hbm [shape: f32[384,128], index: 2, kind: input, shape index: {}]
  %s3 = inlined_call_operand.hbm [shape: f32[1,128], index: 3, kind: input, shape index: {}]
  %s4 = inlined_call_operand.hbm [shape: f32[1,128], index: 4, kind: input, shape index: {}]
  %s5 = inlined_call_operand.hbm [shape: f32[1,128], index: 5, kind: input, shape index: {}]
  %s6 = inlined_call_operand.hbm [shape: f32[1,128], index: 6, kind: input, shape index: {}]
  %s7 = inlined_call_operand.hbm [shape: f32[32,128], index: 7, kind: output, shape index: {}]
  %s8 = sld [smem:[#allocation0]]
  $region66: #{basic_block.1} parent=0
    _
  %s10 = ssub.s32 1, %s8
  %s11 = scalar_select 0, %s10, %s8
  $region1: #{basic_block.1} parent=0
    #allocation2 [shape = 'u8[16384]{0}', space=vmem, size = 0x4000, scoped, tag = 'input window, operand 0, single buffered']
    #allocation3 [shape = 's32[1]{0}', space=sflag, size = 0x4, scoped, tag = 'scoped memory for basic_block.1']
    #allocation4 [shape = 's32[1]{0}', space=sflag, size = 0x4, scoped, tag = 'scoped memory for basic_block.1']
    #allocation5 [shape = 'u8[196608]{0}', space=vmem, size = 0x30000, scoped, tag = 'input window, operand 1, single buffered']
    #allocation6 [shape = 's32[1]{0}', space=sflag, size = 0x4, scoped, tag = 'scoped memory for basic_block.1']
    #allocation7 [shape = 'u8[196608]{0}', space=vmem, size = 0x30000, scoped, tag = 'input window, operand 2, single buffered']
    #allocation8 [shape = 'u8[512]{0}', space=vmem, size = 0x400, scoped, tag = 'input window, operand 3, single buffered']
    #allocation9 [shape = 's32[1]{0}', space=sflag, size = 0x4, scoped, tag = 'scoped memory for basic_block.1']
    #allocation10 [shape = 'u8[512]{0}', space=vmem, size = 0x400, scoped, tag = 'input window, operand 4, single buffered']
    #allocation11 [shape = 'u8[512]{0}', space=vmem, size = 0x400, scoped, tag = 'input window, operand 5, single buffered']
    #allocation12 [shape = 's32[1]{0}', space=sflag, size = 0x4, scoped, tag = 'scoped memory for basic_block.1']
    #allocation13 [shape = 'u8[512]{0}', space=vmem, size = 0x400, scoped, tag = 'input window, operand 6, single buffered']
    #allocation14 [shape = 'u8[16384]{0}', space=vmem, size = 0x4000, scoped, tag = 'output window, operand 0, single buffered']
    %12 = vsyncpa [#allocation3], 0
    %13 = vsyncpa [#allocation6], 0
    %14 = vsyncpa [#allocation9], 0
    %15 = vsyncpa [#allocation12], 0
    %16 = vsyncpa [#allocation4], 0
    // Predicated region
    $region2: #{basic_block.1} parent=1 // pred_check
      _
    $region3: #{basic_block.1} parent=1 // pred_check_branch
      %18 = sbr.rel (0) target = $region5
    $region4: #{basic_block.1} parent=1 // pred_region
      %s20 = ssub.s32 512, 512
      %21 = vsyncadd [#allocation3], %s20
      %s22 = sshll.u32 [#allocation2], 4
      %s23 = int_to_ptr.vmem [resolvable:$true] %s22
      %28 = dma.hbm_to_vmem [thread:$0]  %s0, 512, %s23, [#allocation3], 128, 128, 8
    $region5: #{basic_block.1} parent=1 // pred_fallthru
      _
    // Predicated region
    $region6: #{basic_block.1} parent=1 // pred_check
      _
    $region7: #{basic_block.1} parent=1 // pred_check_branch
      %30 = sbr.rel (0) target = $region9
    $region8: #{basic_block.1} parent=1 // pred_region
      %s32 = ssub.s32 6144, 6144
      %33 = vsyncadd [#allocation6], %s32
      %s34 = sshll.u32 [#allocation5], 4
      %s35 = int_to_ptr.vmem [resolvable:$true] %s34
      %40 = dma.hbm_to_vmem [thread:$0]  %s1, 6144, %s35, [#allocation6], 128, 128, 8
    $region9: #{basic_block.1} parent=1 // pred_fallthru
      _
    // Predicated region
    $region10: #{basic_block.1} parent=1 // pred_check
      _
    $region11: #{basic_block.1} parent=1 // pred_check_branch
      %42 = sbr.rel (0) target = $region13
    $region12: #{basic_block.1} parent=1 // pred_region
      %s44 = ssub.s32 6144, 6144
      %45 = vsyncadd [#allocation6], %s44
      %s46 = sshll.u32 [#allocation7], 4
      %s47 = int_to_ptr.vmem [resolvable:$true] %s46
      %52 = dma.hbm_to_vmem [thread:$0]  %s2, 6144, %s47, [#allocation6], 128, 128, 8
    $region13: #{basic_block.1} parent=1 // pred_fallthru
      _
    // Predicated region
    $region14: #{basic_block.1} parent=1 // pred_check
      _
    $region15: #{basic_block.1} parent=1 // pred_check_branch
      %54 = sbr.rel (0) target = $region17
    $region16: #{basic_block.1} parent=1 // pred_region
      %s56 = ssub.s32 16, 16
      %57 = vsyncadd [#allocation9], %s56
      %s59 = sshll.u32 [#allocation8], 4
      %s60 = int_to_ptr.vmem [resolvable:$true] %s59
      %62 = dma.hbm_to_vmem [thread:$0]  %s3, 16, %s60, [#allocation9]
    $region17: #{basic_block.1} parent=1 // pred_fallthru
      _
    // Predicated region
    $region18: #{basic_block.1} parent=1 // pred_check
      _
    $region19: #{basic_block.1} parent=1 // pred_check_branch
      %64 = sbr.rel (0) target = $region21
    $region20: #{basic_block.1} parent=1 // pred_region
      %s66 = ssub.s32 16, 16
      %67 = vsyncadd [#allocation9], %s66
      %s69 = sshll.u32 [#allocation10], 4
      %s70 = int_to_ptr.vmem [resolvable:$true] %s69
      %72 = dma.hbm_to_vmem [thread:$0]  %s4, 16, %s70, [#allocation9]
    $region21: #{basic_block.1} parent=1 // pred_fallthru
      _
    // Predicated region
    $region22: #{basic_block.1} parent=1 // pred_check
      _
    $region23: #{basic_block.1} parent=1 // pred_check_branch
      %74 = sbr.rel (0) target = $region25
    $region24: #{basic_block.1} parent=1 // pred_region
      %s76 = ssub.s32 16, 16
      %77 = vsyncadd [#allocation12], %s76
      %s79 = sshll.u32 [#allocation11], 4
      %s80 = int_to_ptr.vmem [resolvable:$true] %s79
      %82 = dma.hbm_to_vmem [thread:$0]  %s5, 16, %s80, [#allocation12]
    $region25: #{basic_block.1} parent=1 // pred_fallthru
      _
    // Predicated region
    $region26: #{basic_block.1} parent=1 // pred_check
      _
    $region27: #{basic_block.1} parent=1 // pred_check_branch
      %84 = sbr.rel (0) target = $region29
    $region28: #{basic_block.1} parent=1 // pred_region
      %s86 = ssub.s32 16, 16
      %87 = vsyncadd [#allocation12], %s86
      %s89 = sshll.u32 [#allocation13], 4
      %s90 = int_to_ptr.vmem [resolvable:$true] %s89
      %92 = dma.hbm_to_vmem [thread:$0]  %s6, 16, %s90, [#allocation12]
    $region29: #{basic_block.1} parent=1 // pred_fallthru
      _
    // Predicated region
    $region30: #{basic_block.1} parent=1 // pred_check
      _
    $region31: #{basic_block.1} parent=1 // pred_check_branch
      %94 = sbr.rel (0) target = $region33
    $region32: #{basic_block.1} parent=1 // pred_region
      %95 = dma.done [#allocation3], 512
    $region33: #{basic_block.1} parent=1 // pred_fallthru
      _
    // Predicated region
    $region34: #{basic_block.1} parent=1 // pred_check
      _
    $region35: #{basic_block.1} parent=1 // pred_check_branch
      %97 = sbr.rel (0) target = $region37
    $region36: #{basic_block.1} parent=1 // pred_region
      %98 = dma.done [#allocation6], 6144
    $region37: #{basic_block.1} parent=1 // pred_fallthru
      _
    // Predicated region
    $region38: #{basic_block.1} parent=1 // pred_check
      _
    $region39: #{basic_block.1} parent=1 // pred_check_branch
      %100 = sbr.rel (0) target = $region41
    $region40: #{basic_block.1} parent=1 // pred_region
      %101 = dma.done [#allocation6], 6144
    $region41: #{basic_block.1} parent=1 // pred_fallthru
      _
    // Predicated region
    $region42: #{basic_block.1} parent=1 // pred_check
      _
    $region43: #{basic_block.1} parent=1 // pred_check_branch
      %103 = sbr.rel (0) target = $region45
    $region44: #{basic_block.1} parent=1 // pred_region
      %104 = dma.done [#allocation9], 16
    $region45: #{basic_block.1} parent=1 // pred_fallthru
      _
    // Predicated region
    $region46: #{basic_block.1} parent=1 // pred_check
      _
    $region47: #{basic_block.1} parent=1 // pred_check_branch
      %106 = sbr.rel (0) target = $region49
    $region48: #{basic_block.1} parent=1 // pred_region
      %107 = dma.done [#allocation9], 16
    $region49: #{basic_block.1} parent=1 // pred_fallthru
      _
    // Predicated region
    $region50: #{basic_block.1} parent=1 // pred_check
      _
    $region51: #{basic_block.1} parent=1 // pred_check_branch
      %109 = sbr.rel (0) target = $region53
    $region52: #{basic_block.1} parent=1 // pred_region
      %110 = dma.done [#allocation12], 16
    $region53: #{basic_block.1} parent=1 // pred_fallthru
      _
    // Predicated region
    $region54: #{basic_block.1} parent=1 // pred_check
      _
    $region55: #{basic_block.1} parent=1 // pred_check_branch
      %112 = sbr.rel (0) target = $region57
    $region56: #{basic_block.1} parent=1 // pred_region
      %113 = dma.done [#allocation12], 16
    $region57: #{basic_block.1} parent=1 // pred_fallthru
      _
    %v114 = vld [vmem:[#allocation2] sm:$0xff]
    %v115 = vld [vmem:[#allocation2 + $0x8] sm:$0xff]
    %v116 = vld [vmem:[#allocation2 + $0x10] sm:$0xff]
    %v117 = vld [vmem:[#allocation2 + $0x18] sm:$0xff]
    %v118 = vlaneseq
    %v119 = vshrl.u32 %v118, 7
    %v120 = vadd.s32 %v119, 8
    %v121 = vadd.s32 %v119, 16
    %v122 = vadd.s32 %v119, 24
    %vm123 = vcmp.lt.s32.totalorder %v119, 0
    %v124 = vsub.s32 0, %v119
    %v125 = vsel %vm123, %v124, %v119
    %v126 = vshrl.u32 %v125, 4
    %v127 = vand.u32 %v125, 15
    %v128 = vsub.s32 0, %v127
    %v129 = vsel %vm123, %v128, %v127
    %vm130 = vcmp.lt.s32.totalorder %v120, 0
    %v131 = vsub.s32 0, %v120
    %v132 = vsel %vm130, %v131, %v120
    %v133 = vshrl.u32 %v132, 4
    %v134 = vand.u32 %v132, 15
    %v135 = vsub.s32 0, %v134
    %v136 = vsel %vm130, %v135, %v134
    %vm137 = vcmp.lt.s32.totalorder %v121, 0
    %v138 = vsub.s32 0, %v121
    %v139 = vsel %vm137, %v138, %v121
    %v140 = vshrl.u32 %v139, 4
    %v141 = vand.u32 %v139, 15
    %v142 = vsub.s32 0, %v141
    %v143 = vsel %vm137, %v142, %v141
    %vm144 = vcmp.lt.s32.totalorder %v122, 0
    %v145 = vsub.s32 0, %v122
    %v146 = vsel %vm144, %v145, %v122
    %v147 = vshrl.u32 %v146, 4
    %v148 = vand.u32 %v146, 15
    %v149 = vsub.s32 0, %v148
    %v150 = vsel %vm144, %v149, %v148
    %vm151 = vcmp.ne.s32.totalorder %v129, 0
    %vm152 = vcmp.ne.s32.totalorder %v136, 0
    %vm153 = vcmp.ne.s32.totalorder %v143, 0
    %vm154 = vcmp.ne.s32.totalorder %v150, 0
    %vm155 = vcmp.lt.s32.totalorder %v129, 0
    %vm156 = vcmp.lt.s32.totalorder %v136, 0
    %vm157 = vcmp.lt.s32.totalorder %v143, 0
    %vm158 = vcmp.lt.s32.totalorder %v150, 0
    %vm159 = vmand %vm155, %vm151
    %vm160 = vmand %vm156, %vm152
    %vm161 = vmand %vm157, %vm153
    %vm162 = vmand %vm158, %vm154
    %v163 = vadd.s32 %v129, 16
    %v164 = vadd.s32 %v136, 16
    %v165 = vadd.s32 %v143, 16
    %v166 = vadd.s32 %v150, 16
    %v167 = vsel %vm159, %v163, %v129
    %v168 = vsel %vm160, %v164, %v136
    %v169 = vsel %vm161, %v165, %v143
    %v170 = vsel %vm162, %v166, %v150
    %vm171 = vcmp.gt.s32.totalorder %v167, 0
    %vm172 = vcmp.gt.s32.totalorder %v168, 0
    %vm173 = vcmp.gt.s32.totalorder %v169, 0
    %vm174 = vcmp.gt.s32.totalorder %v170, 0
    %v175 = vsel %vm171, 1, 0
    %v176 = vsel %vm172, 1, 0
    %v177 = vsel %vm173, 1, 0
    %v178 = vsel %vm174, 1, 0
    %v179 = vcvt.s32.f32 %v175
    %v180 = vcvt.s32.f32 %v176
    %v181 = vcvt.s32.f32 %v177
    %v182 = vcvt.s32.f32 %v178
    %vm183 = vcmp.lt.s32.totalorder %v167, 15
    %vm184 = vcmp.lt.s32.totalorder %v168, 15
    %vm185 = vcmp.lt.s32.totalorder %v169, 15
    %vm186 = vcmp.lt.s32.totalorder %v170, 15
    %v187 = vsel %vm183, 1, 0
    %v188 = vsel %vm184, 1, 0
    %v189 = vsel %vm185, 1, 0
    %v190 = vsel %vm186, 1, 0
    %v191 = vcvt.s32.f32 %v187
    %v192 = vcvt.s32.f32 %v188
    %v193 = vcvt.s32.f32 %v189
    %v194 = vcvt.s32.f32 %v190
    %v195 = vrot.slane %v114, 7
    %v196 = vrot.slane %v115, 7
    %v197 = vrot.slane %v116, 7
    %v198 = vrot.slane %v117, 7
    %vm199 = vcmp.lt.s32.totalorder %v119, 1
    %v200 = vsel %vm199, %v197, %v198
    %v201 = vsel %vm199, %v196, %v197
    %v202 = vsel %vm199, %v195, %v196
    %v203 = vsel %vm199, %v198, %v195
    %v204 = vmul.f32 %v203, %v179
    %v205 = vmul.f32 %v202, %v180
    %v206 = vmul.f32 %v201, %v181
    %v207 = vmul.f32 %v200, %v182
    %v208 = vrot.slane %v114, 1
    %v209 = vrot.slane %v115, 1
    %v210 = vrot.slane %v116, 1
    %v211 = vrot.slane %v117, 1
    %vm212 = vcmp.lt.s32.totalorder %v119, 7
    %v213 = vsel %vm212, %v210, %v211
    %v214 = vsel %vm212, %v209, %v210
    %v215 = vsel %vm212, %v208, %v209
    %v216 = vsel %vm212, %v211, %v208
    %v217 = vmul.f32 %v215, %v191
    %v218 = vmul.f32 %v214, %v192
    %v219 = vmul.f32 %v213, %v193
    %v220 = vmul.f32 %v216, %v194
    %v221 = vld [vmem:[#allocation5] sm:$0xff]
    %v222 = vld [vmem:[#allocation5 + $0x8] sm:$0xff]
    %v223 = vld [vmem:[#allocation5 + $0x10] sm:$0xff]
    %v224 = vld [vmem:[#allocation5 + $0x18] sm:$0xff]
    %v225 = vld [vmem:[#allocation5 + $0x20] sm:$0xff]
    %v226 = vld [vmem:[#allocation5 + $0x28] sm:$0xff]
    %v227 = vld [vmem:[#allocation5 + $0x30] sm:$0xff]
    %v228 = vld [vmem:[#allocation5 + $0x38] sm:$0xff]
    %v229 = vld [vmem:[#allocation5 + $0x40] sm:$0xff]
    %v230 = vld [vmem:[#allocation5 + $0x48] sm:$0xff]
    %v231 = vld [vmem:[#allocation5 + $0x50] sm:$0xff]
    %v232 = vld [vmem:[#allocation5 + $0x58] sm:$0xff]
    %v233 = vld [vmem:[#allocation5 + $0x60] sm:$0xff]
    %v234 = vld [vmem:[#allocation5 + $0x68] sm:$0xff]
    %v235 = vld [vmem:[#allocation5 + $0x70] sm:$0xff]
    %v236 = vld [vmem:[#allocation5 + $0x78] sm:$0xff]
    %v237 = vld [vmem:[#allocation5 + $0x80] sm:$0xff]
    %v238 = vld [vmem:[#allocation5 + $0x88] sm:$0xff]
    %v239 = vld [vmem:[#allocation5 + $0x90] sm:$0xff]
    %v240 = vld [vmem:[#allocation5 + $0x98] sm:$0xff]
    %v241 = vld [vmem:[#allocation5 + $0xa0] sm:$0xff]
    %v242 = vld [vmem:[#allocation5 + $0xa8] sm:$0xff]
    %v243 = vld [vmem:[#allocation5 + $0xb0] sm:$0xff]
    %v244 = vld [vmem:[#allocation5 + $0xb8] sm:$0xff]
    %v245 = vld [vmem:[#allocation5 + $0xc0] sm:$0xff]
    %v246 = vld [vmem:[#allocation5 + $0xc8] sm:$0xff]
    %v247 = vld [vmem:[#allocation5 + $0xd0] sm:$0xff]
    %v248 = vld [vmem:[#allocation5 + $0xd8] sm:$0xff]
    %v249 = vld [vmem:[#allocation5 + $0xe0] sm:$0xff]
    %v250 = vld [vmem:[#allocation5 + $0xe8] sm:$0xff]
    %v251 = vld [vmem:[#allocation5 + $0xf0] sm:$0xff]
    %v252 = vld [vmem:[#allocation5 + $0xf8] sm:$0xff]
    %v253 = vld [vmem:[#allocation5 + $0x100] sm:$0xff]
    %v254 = vld [vmem:[#allocation5 + $0x108] sm:$0xff]
    %v255 = vld [vmem:[#allocation5 + $0x110] sm:$0xff]
    %v256 = vld [vmem:[#allocation5 + $0x118] sm:$0xff]
    %v257 = vld [vmem:[#allocation5 + $0x120] sm:$0xff]
    %v258 = vld [vmem:[#allocation5 + $0x128] sm:$0xff]
    %v259 = vld [vmem:[#allocation5 + $0x130] sm:$0xff]
    %v260 = vld [vmem:[#allocation5 + $0x138] sm:$0xff]
    %v261 = vld [vmem:[#allocation5 + $0x140] sm:$0xff]
    %v262 = vld [vmem:[#allocation5 + $0x148] sm:$0xff]
    %v263 = vld [vmem:[#allocation5 + $0x150] sm:$0xff]
    %v264 = vld [vmem:[#allocation5 + $0x158] sm:$0xff]
    %v265 = vld [vmem:[#allocation5 + $0x160] sm:$0xff]
    %v266 = vld [vmem:[#allocation5 + $0x168] sm:$0xff]
    %v267 = vld [vmem:[#allocation5 + $0x170] sm:$0xff]
    %v268 = vld [vmem:[#allocation5 + $0x178] sm:$0xff]
    %269 = vmatprep.subr.mxu0 0.0
    %270 = vmatpush1.msra.mxu0 %v221
    %271 = vmatprep.subr.mxu0 0.0
    %272 = vmatpush1.msra.mxu0 %v222
    %273 = vmatprep.subr.mxu0 0.0
    %274 = vmatpush1.msra.mxu0 %v223
    %275 = vmatprep.subr.mxu0 0.0
    %276 = vmatpush1.msra.mxu0 %v224
    %277 = vmatprep.subr.mxu0 0.0
    %278 = vmatpush1.msra.mxu0 %v225
    %279 = vmatprep.subr.mxu0 0.0
    %280 = vmatpush1.msra.mxu0 %v226
    %281 = vmatprep.subr.mxu0 0.0
    %282 = vmatpush1.msra.mxu0 %v227
    %283 = vmatprep.subr.mxu0 0.0
    %284 = vmatpush1.msra.mxu0 %v228
    %285 = vmatprep.subr.mxu0 0.0
    %286 = vmatpush1.msra.mxu0 %v229
    %287 = vmatprep.subr.mxu0 0.0
    %288 = vmatpush1.msra.mxu0 %v230
    %289 = vmatprep.subr.mxu0 0.0
    %290 = vmatpush1.msra.mxu0 %v231
    %291 = vmatprep.subr.mxu0 0.0
    %292 = vmatpush1.msra.mxu0 %v232
    %293 = vmatprep.subr.mxu0 0.0
    %294 = vmatpush1.msra.mxu0 %v233
    %295 = vmatprep.subr.mxu0 0.0
    %296 = vmatpush1.msra.mxu0 %v234
    %297 = vmatprep.subr.mxu0 0.0
    %298 = vmatpush1.msra.mxu0 %v235
    %299 = vmatprep.subr.mxu0 0.0
    %300 = vmatpush1.msra.mxu0 %v236
    %301 = vmatprep.subr.mxu0 0.0
    %302 = vmatpush1.msra.mxu0 %v237
    %303 = vmatprep.subr.mxu0 0.0
    %304 = vmatpush1.msra.mxu0 %v238
    %305 = vmatprep.subr.mxu0 0.0
    %306 = vmatpush1.msra.mxu0 %v239
    %307 = vmatprep.subr.mxu0 0.0
    %308 = vmatpush1.msra.mxu0 %v240
    %309 = vmatprep.subr.mxu0 0.0
    %310 = vmatpush1.msra.mxu0 %v241
    %311 = vmatprep.subr.mxu0 0.0
    %312 = vmatpush1.msra.mxu0 %v242
    %313 = vmatprep.subr.mxu0 0.0
    %314 = vmatpush1.msra.mxu0 %v243
    %315 = vmatprep.subr.mxu0 0.0
    %316 = vmatpush1.msra.mxu0 %v244
    %317 = vmatprep.subr.mxu0 0.0
    %318 = vmatpush1.msra.mxu0 %v245
    %319 = vmatprep.subr.mxu0 0.0
    %320 = vmatpush1.msra.mxu0 %v246
    %321 = vmatprep.subr.mxu0 0.0
    %322 = vmatpush1.msra.mxu0 %v247
    %323 = vmatprep.subr.mxu0 0.0
    %324 = vmatpush1.msra.mxu0 %v248
    %325 = vmatprep.subr.mxu0 0.0
    %326 = vmatpush1.msra.mxu0 %v249
    %327 = vmatprep.subr.mxu0 0.0
    %328 = vmatpush1.msra.mxu0 %v250
    %329 = vmatprep.subr.mxu0 0.0
    %330 = vmatpush1.msra.mxu0 %v251
    %331 = vmatprep.subr.mxu0 0.0
    %332 = vmatpush1.msra.mxu0 %v252
    %333 = vmatprep.mubr.f32.mxu0 %v114
    %334 = vmatmul.mubr.f32.gmra.mrb[0].mxu0 %v204
    %v335 = vpop.f32.mrb[0].mxu0
    %v336 = vadd.f32 0.0, %v335
    %v337 = vpop.f32.mrb[0].mxu0
    %338 = vmatprep.mubr.f32.mxu0 %v115
    %339 = vmatmul.mubr.f32.gmra.mrb[0].mxu0 %v205
    %v340 = vpop.f32.mrb[0].mxu0
    %v341 = vadd.f32 0.0, %v340
    %v342 = vpop.f32.mrb[0].mxu0
    %343 = vmatprep.mubr.f32.mxu0 %v116
    %344 = vmatmul.mubr.f32.gmra.mrb[0].mxu0 %v206
    %v345 = vpop.f32.mrb[0].mxu0
    %v346 = vadd.f32 0.0, %v345
    %v347 = vpop.f32.mrb[0].mxu0
    %348 = vmatprep.mubr.f32.mxu0 %v117
    %349 = vmatmul.mubr.f32.gmra.mrb[0].mxu0 %v207
    %v350 = vpop.f32.mrb[0].mxu0
    %v351 = vadd.f32 0.0, %v350
    %v352 = vpop.f32.mrb[0].mxu0
    %353 = vdwg.mxu0
    %354 = vmatprep.subr.mxu0 0.0
    %355 = vmatpush1.msra.mxu0 %v253
    %356 = vmatprep.subr.mxu0 0.0
    %357 = vmatpush1.msra.mxu0 %v254
    %358 = vmatprep.subr.mxu0 0.0
    %359 = vmatpush1.msra.mxu0 %v255
    %360 = vmatprep.subr.mxu0 0.0
    %361 = vmatpush1.msra.mxu0 %v256
    %362 = vmatprep.subr.mxu0 0.0
    %363 = vmatpush1.msra.mxu0 %v257
    %364 = vmatprep.subr.mxu0 0.0
    %365 = vmatpush1.msra.mxu0 %v258
    %366 = vmatprep.subr.mxu0 0.0
    %367 = vmatpush1.msra.mxu0 %v259
    %368 = vmatprep.subr.mxu0 0.0
    %369 = vmatpush1.msra.mxu0 %v260
    %370 = vmatprep.subr.mxu0 0.0
    %371 = vmatpush1.msra.mxu0 %v261
    %372 = vmatprep.subr.mxu0 0.0
    %373 = vmatpush1.msra.mxu0 %v262
    %374 = vmatprep.subr.mxu0 0.0
    %375 = vmatpush1.msra.mxu0 %v263
    %376 = vmatprep.subr.mxu0 0.0
    %377 = vmatpush1.msra.mxu0 %v264
    %378 = vmatprep.subr.mxu0 0.0
    %379 = vmatpush1.msra.mxu0 %v265
    %380 = vmatprep.subr.mxu0 0.0
    %381 = vmatpush1.msra.mxu0 %v266
    %382 = vmatprep.subr.mxu0 0.0
    %383 = vmatpush1.msra.mxu0 %v267
    %384 = vmatprep.subr.mxu0 0.0
    %385 = vmatpush1.msra.mxu0 %v268
    %386 = vmatprep.subr.mxu0 0.0
    %387 = vmatpush1.msra.mxu0 0.0
    %388 = vmatprep.subr.mxu0 0.0
    %389 = vmatpush1.msra.mxu0 0.0
    %390 = vmatprep.subr.mxu0 0.0
    %391 = vmatpush1.msra.mxu0 0.0
    %392 = vmatprep.subr.mxu0 0.0
    %393 = vmatpush1.msra.mxu0 0.0
    %394 = vmatprep.subr.mxu0 0.0
    %395 = vmatpush1.msra.mxu0 0.0
    %396 = vmatprep.subr.mxu0 0.0
    %397 = vmatpush1.msra.mxu0 0.0
    %398 = vmatprep.subr.mxu0 0.0
    %399 = vmatpush1.msra.mxu0 0.0
    %400 = vmatprep.subr.mxu0 0.0
    %401 = vmatpush1.msra.mxu0 0.0
    %402 = vmatprep.subr.mxu0 0.0
    %403 = vmatpush1.msra.mxu0 0.0
    %404 = vmatprep.subr.mxu0 0.0
    %405 = vmatpush1.msra.mxu0 0.0
    %406 = vmatprep.subr.mxu0 0.0
    %407 = vmatpush1.msra.mxu0 0.0
    %408 = vmatprep.subr.mxu0 0.0
    %409 = vmatpush1.msra.mxu0 0.0
    %410 = vmatprep.subr.mxu0 0.0
    %411 = vmatpush1.msra.mxu0 0.0
    %412 = vmatprep.subr.mxu0 0.0
    %413 = vmatpush1.msra.mxu0 0.0
    %414 = vmatprep.subr.mxu0 0.0
    %415 = vmatpush1.msra.mxu0 0.0
    %416 = vmatprep.subr.mxu0 0.0
    %417 = vmatpush1.msra.mxu0 0.0
    %418 = vmatprep.mubr.f32.mxu0 0.0
    %419 = vmatmul.mubr.f32.gmra.mrb[0].mxu0 %v217
    %v420 = vpop.f32.mrb[0].mxu0
    %v421 = vadd.f32 %v336, %v420
    %v422 = vpop.f32.mrb[0].mxu0
    %423 = vmatprep.mubr.f32.mxu0 0.0
    %424 = vmatmul.mubr.f32.gmra.mrb[0].mxu0 %v218
    %v425 = vpop.f32.mrb[0].mxu0
    %v426 = vadd.f32 %v341, %v425
    %v427 = vpop.f32.mrb[0].mxu0
    %428 = vmatprep.mubr.f32.mxu0 0.0
    %429 = vmatmul.mubr.f32.gmra.mrb[0].mxu0 %v219
    %v430 = vpop.f32.mrb[0].mxu0
    %v431 = vadd.f32 %v346, %v430
    %v432 = vpop.f32.mrb[0].mxu0
    %433 = vmatprep.mubr.f32.mxu0 0.0
    %434 = vmatmul.mubr.f32.gmra.mrb[0].mxu0 %v220
    %v435 = vpop.f32.mrb[0].mxu0
    %v436 = vadd.f32 %v351, %v435
    %v437 = vpop.f32.mrb[0].mxu0
    %438 = vdwg.mxu0
    %v439 = vld [vmem:[#allocation8] sm:$0x1]
    %v440 = vld [vmem:[#allocation10] sm:$0x1]
    %v441 = vadd.f32 %v421, %v426
    %v442 = vadd.f32 %v441, %v431
    %v443 = vadd.f32 %v442, %v436
    %v444 = vrot.slane %v443, 4
    %v445 = vadd.f32 %v443, %v444
    %v446 = vrot.slane %v445, 2
    %v447 = vadd.f32 %v445, %v446
    %v448 = vrot.slane %v447, 1
    %v449 = vadd.f32 %v447, %v448
    %450 = vrot.lane.b32.xlu0 %v449, 8
    %v451 = vpop.permute.xlu0 %450
    %v452 = vadd.f32 %v449, %v451
    %453 = vrot.lane.b32.xlu0 %v452, 16
    %v454 = vpop.permute.xlu0 %453
    %v455 = vadd.f32 %v452, %v454
    %456 = vrot.lane.b32.xlu0 %v455, 32
    %v457 = vpop.permute.xlu0 %456
    %v458 = vadd.f32 %v455, %v457
    %459 = vrot.lane.b32.xlu0 %v458, 64
    %v460 = vpop.permute.xlu0 %459
    %v461 = vadd.f32 %v458, %v460
    %v462 = vmul.f32 %v461, 0.001953125
    %v463 = vlaneseq
    %v464 = vshrl.u32 %v463, 7
    %v465 = vsub.s32 0, %v464
    %v466 = vrot.slane %v462, %v465
    %v467 = vsub.f32 %v421, %v466
    %v468 = vsub.f32 %v426, %v466
    %v469 = vsub.f32 %v431, %v466
    %v470 = vsub.f32 %v436, %v466
    %v471 = vmul.f32 %v467, %v467
    %v472 = vmul.f32 %v468, %v468
    %v473 = vmul.f32 %v469, %v469
    %v474 = vmul.f32 %v470, %v470
    %v475 = vadd.f32 %v471, %v472
    %v476 = vadd.f32 %v475, %v473
    %v477 = vadd.f32 %v476, %v474
    %v478 = vrot.slane %v477, 4
    %v479 = vadd.f32 %v477, %v478
    %v480 = vrot.slane %v479, 2
    %v481 = vadd.f32 %v479, %v480
    %v482 = vrot.slane %v481, 1
    %v483 = vadd.f32 %v481, %v482
    %484 = vrot.lane.b32.xlu0 %v483, 8
    %v485 = vpop.permute.xlu0 %484
    %v486 = vadd.f32 %v483, %v485
    %487 = vrot.lane.b32.xlu0 %v486, 16
    %v488 = vpop.permute.xlu0 %487
    %v489 = vadd.f32 %v486, %v488
    %490 = vrot.lane.b32.xlu0 %v489, 32
    %v491 = vpop.permute.xlu0 %490
    %v492 = vadd.f32 %v489, %v491
    %493 = vrot.lane.b32.xlu0 %v492, 64
    %v494 = vpop.permute.xlu0 %493
    %v495 = vadd.f32 %v492, %v494
    %v496 = vmul.f32 %v495, 0.001953125
    %v497 = vadd.f32 %v496, 1e-05
    %v498 = vrsqrt.pop %v497
    %v499 = vmul.f32 %v439, %v498
    %v501 = vlaneseq
    %v502 = vshrl.u32 %v501, 7
    %v503 = vsub.s32 0, %v502
    %v504 = vrot.slane %v499, %v503
    %v506 = vmul.f32 %v467, %v504
    %v507 = vmul.f32 %v468, %v504
    %v508 = vmul.f32 %v469, %v504
    %v509 = vmul.f32 %v470, %v504
    %v511 = vlaneseq
    %v512 = vshrl.u32 %v511, 7
    %v513 = vsub.s32 0, %v512
    %v514 = vrot.slane %v440, %v513
    %v516 = vadd.f32 %v506, %v514
    %v517 = vadd.f32 %v507, %v514
    %v518 = vadd.f32 %v508, %v514
    %v519 = vadd.f32 %v509, %v514
    %v520 = vmax.f32 %v516, 0.0
    %v521 = vmax.f32 %v517, 0.0
    %v522 = vmax.f32 %v518, 0.0
    %v523 = vmax.f32 %v519, 0.0
    %v524 = vrot.slane %v520, 7
    %v525 = vrot.slane %v521, 7
    %v526 = vrot.slane %v522, 7
    %v527 = vrot.slane %v523, 7
    %v528 = vsel %vm199, %v526, %v527
    %v529 = vsel %vm199, %v525, %v526
    %v530 = vsel %vm199, %v524, %v525
    %v531 = vsel %vm199, %v527, %v524
    %v532 = vmul.f32 %v531, %v179
    %v533 = vmul.f32 %v530, %v180
    %v534 = vmul.f32 %v529, %v181
    %v535 = vmul.f32 %v528, %v182
    %v536 = vrot.slane %v520, 1
    %v537 = vrot.slane %v521, 1
    %v538 = vrot.slane %v522, 1
    %v539 = vrot.slane %v523, 1
    %v540 = vsel %vm212, %v538, %v539
    %v541 = vsel %vm212, %v537, %v538
    %v542 = vsel %vm212, %v536, %v537
    %v543 = vsel %vm212, %v539, %v536
    %v544 = vmul.f32 %v542, %v191
    %v545 = vmul.f32 %v541, %v192
    %v546 = vmul.f32 %v540, %v193
    %v547 = vmul.f32 %v543, %v194
    %v548 = vld [vmem:[#allocation7] sm:$0xff]
    %v549 = vld [vmem:[#allocation7 + $0x8] sm:$0xff]
    %v550 = vld [vmem:[#allocation7 + $0x10] sm:$0xff]
    %v551 = vld [vmem:[#allocation7 + $0x18] sm:$0xff]
    %v552 = vld [vmem:[#allocation7 + $0x20] sm:$0xff]
    %v553 = vld [vmem:[#allocation7 + $0x28] sm:$0xff]
    %v554 = vld [vmem:[#allocation7 + $0x30] sm:$0xff]
    %v555 = vld [vmem:[#allocation7 + $0x38] sm:$0xff]
    %v556 = vld [vmem:[#allocation7 + $0x40] sm:$0xff]
    %v557 = vld [vmem:[#allocation7 + $0x48] sm:$0xff]
    %v558 = vld [vmem:[#allocation7 + $0x50] sm:$0xff]
    %v559 = vld [vmem:[#allocation7 + $0x58] sm:$0xff]
    %v560 = vld [vmem:[#allocation7 + $0x60] sm:$0xff]
    %v561 = vld [vmem:[#allocation7 + $0x68] sm:$0xff]
    %v562 = vld [vmem:[#allocation7 + $0x70] sm:$0xff]
    %v563 = vld [vmem:[#allocation7 + $0x78] sm:$0xff]
    %v564 = vld [vmem:[#allocation7 + $0x80] sm:$0xff]
    %v565 = vld [vmem:[#allocation7 + $0x88] sm:$0xff]
    %v566 = vld [vmem:[#allocation7 + $0x90] sm:$0xff]
    %v567 = vld [vmem:[#allocation7 + $0x98] sm:$0xff]
    %v568 = vld [vmem:[#allocation7 + $0xa0] sm:$0xff]
    %v569 = vld [vmem:[#allocation7 + $0xa8] sm:$0xff]
    %v570 = vld [vmem:[#allocation7 + $0xb0] sm:$0xff]
    %v571 = vld [vmem:[#allocation7 + $0xb8] sm:$0xff]
    %v572 = vld [vmem:[#allocation7 + $0xc0] sm:$0xff]
    %v573 = vld [vmem:[#allocation7 + $0xc8] sm:$0xff]
    %v574 = vld [vmem:[#allocation7 + $0xd0] sm:$0xff]
    %v575 = vld [vmem:[#allocation7 + $0xd8] sm:$0xff]
    %v576 = vld [vmem:[#allocation7 + $0xe0] sm:$0xff]
    %v577 = vld [vmem:[#allocation7 + $0xe8] sm:$0xff]
    %v578 = vld [vmem:[#allocation7 + $0xf0] sm:$0xff]
    %v579 = vld [vmem:[#allocation7 + $0xf8] sm:$0xff]
    %v580 = vld [vmem:[#allocation7 + $0x100] sm:$0xff]
    %v581 = vld [vmem:[#allocation7 + $0x108] sm:$0xff]
    %v582 = vld [vmem:[#allocation7 + $0x110] sm:$0xff]
    %v583 = vld [vmem:[#allocation7 + $0x118] sm:$0xff]
    %v584 = vld [vmem:[#allocation7 + $0x120] sm:$0xff]
    %v585 = vld [vmem:[#allocation7 + $0x128] sm:$0xff]
    %v586 = vld [vmem:[#allocation7 + $0x130] sm:$0xff]
    %v587 = vld [vmem:[#allocation7 + $0x138] sm:$0xff]
    %v588 = vld [vmem:[#allocation7 + $0x140] sm:$0xff]
    %v589 = vld [vmem:[#allocation7 + $0x148] sm:$0xff]
    %v590 = vld [vmem:[#allocation7 + $0x150] sm:$0xff]
    %v591 = vld [vmem:[#allocation7 + $0x158] sm:$0xff]
    %v592 = vld [vmem:[#allocation7 + $0x160] sm:$0xff]
    %v593 = vld [vmem:[#allocation7 + $0x168] sm:$0xff]
    %v594 = vld [vmem:[#allocation7 + $0x170] sm:$0xff]
    %v595 = vld [vmem:[#allocation7 + $0x178] sm:$0xff]
    %596 = vmatprep.subr.mxu0 0.0
    %597 = vmatpush1.msra.mxu0 %v548
    %598 = vmatprep.subr.mxu0 0.0
    %599 = vmatpush1.msra.mxu0 %v549
    %600 = vmatprep.subr.mxu0 0.0
    %601 = vmatpush1.msra.mxu0 %v550
    %602 = vmatprep.subr.mxu0 0.0
    %603 = vmatpush1.msra.mxu0 %v551
    %604 = vmatprep.subr.mxu0 0.0
    %605 = vmatpush1.msra.mxu0 %v552
    %606 = vmatprep.subr.mxu0 0.0
    %607 = vmatpush1.msra.mxu0 %v553
    %608 = vmatprep.subr.mxu0 0.0
    %609 = vmatpush1.msra.mxu0 %v554
    %610 = vmatprep.subr.mxu0 0.0
    %611 = vmatpush1.msra.mxu0 %v555
    %612 = vmatprep.subr.mxu0 0.0
    %613 = vmatpush1.msra.mxu0 %v556
    %614 = vmatprep.subr.mxu0 0.0
    %615 = vmatpush1.msra.mxu0 %v557
    %616 = vmatprep.subr.mxu0 0.0
    %617 = vmatpush1.msra.mxu0 %v558
    %618 = vmatprep.subr.mxu0 0.0
    %619 = vmatpush1.msra.mxu0 %v559
    %620 = vmatprep.subr.mxu0 0.0
    %621 = vmatpush1.msra.mxu0 %v560
    %622 = vmatprep.subr.mxu0 0.0
    %623 = vmatpush1.msra.mxu0 %v561
    %624 = vmatprep.subr.mxu0 0.0
    %625 = vmatpush1.msra.mxu0 %v562
    %626 = vmatprep.subr.mxu0 0.0
    %627 = vmatpush1.msra.mxu0 %v563
    %628 = vmatprep.subr.mxu0 0.0
    %629 = vmatpush1.msra.mxu0 %v564
    %630 = vmatprep.subr.mxu0 0.0
    %631 = vmatpush1.msra.mxu0 %v565
    %632 = vmatprep.subr.mxu0 0.0
    %633 = vmatpush1.msra.mxu0 %v566
    %634 = vmatprep.subr.mxu0 0.0
    %635 = vmatpush1.msra.mxu0 %v567
    %636 = vmatprep.subr.mxu0 0.0
    %637 = vmatpush1.msra.mxu0 %v568
    %638 = vmatprep.subr.mxu0 0.0
    %639 = vmatpush1.msra.mxu0 %v569
    %640 = vmatprep.subr.mxu0 0.0
    %641 = vmatpush1.msra.mxu0 %v570
    %642 = vmatprep.subr.mxu0 0.0
    %643 = vmatpush1.msra.mxu0 %v571
    %644 = vmatprep.subr.mxu0 0.0
    %645 = vmatpush1.msra.mxu0 %v572
    %646 = vmatprep.subr.mxu0 0.0
    %647 = vmatpush1.msra.mxu0 %v573
    %648 = vmatprep.subr.mxu0 0.0
    %649 = vmatpush1.msra.mxu0 %v574
    %650 = vmatprep.subr.mxu0 0.0
    %651 = vmatpush1.msra.mxu0 %v575
    %652 = vmatprep.subr.mxu0 0.0
    %653 = vmatpush1.msra.mxu0 %v576
    %654 = vmatprep.subr.mxu0 0.0
    %655 = vmatpush1.msra.mxu0 %v577
    %656 = vmatprep.subr.mxu0 0.0
    %657 = vmatpush1.msra.mxu0 %v578
    %658 = vmatprep.subr.mxu0 0.0
    %659 = vmatpush1.msra.mxu0 %v579
    %660 = vmatprep.mubr.f32.mxu0 %v520
    %661 = vmatmul.mubr.f32.gmra.mrb[0].mxu0 %v532
    %v662 = vpop.f32.mrb[0].mxu0
    %v663 = vadd.f32 0.0, %v662
    %v664 = vpop.f32.mrb[0].mxu0
    %665 = vmatprep.mubr.f32.mxu0 %v521
    %666 = vmatmul.mubr.f32.gmra.mrb[0].mxu0 %v533
    %v667 = vpop.f32.mrb[0].mxu0
    %v668 = vadd.f32 0.0, %v667
    %v669 = vpop.f32.mrb[0].mxu0
    %670 = vmatprep.mubr.f32.mxu0 %v522
    %671 = vmatmul.mubr.f32.gmra.mrb[0].mxu0 %v534
    %v672 = vpop.f32.mrb[0].mxu0
    %v673 = vadd.f32 0.0, %v672
    %v674 = vpop.f32.mrb[0].mxu0
    %675 = vmatprep.mubr.f32.mxu0 %v523
    %676 = vmatmul.mubr.f32.gmra.mrb[0].mxu0 %v535
    %v677 = vpop.f32.mrb[0].mxu0
    %v678 = vadd.f32 0.0, %v677
    %v679 = vpop.f32.mrb[0].mxu0
    %680 = vdwg.mxu0
    %681 = vmatprep.subr.mxu0 0.0
    %682 = vmatpush1.msra.mxu0 %v580
    %683 = vmatprep.subr.mxu0 0.0
    %684 = vmatpush1.msra.mxu0 %v581
    %685 = vmatprep.subr.mxu0 0.0
    %686 = vmatpush1.msra.mxu0 %v582
    %687 = vmatprep.subr.mxu0 0.0
    %688 = vmatpush1.msra.mxu0 %v583
    %689 = vmatprep.subr.mxu0 0.0
    %690 = vmatpush1.msra.mxu0 %v584
    %691 = vmatprep.subr.mxu0 0.0
    %692 = vmatpush1.msra.mxu0 %v585
    %693 = vmatprep.subr.mxu0 0.0
    %694 = vmatpush1.msra.mxu0 %v586
    %695 = vmatprep.subr.mxu0 0.0
    %696 = vmatpush1.msra.mxu0 %v587
    %697 = vmatprep.subr.mxu0 0.0
    %698 = vmatpush1.msra.mxu0 %v588
    %699 = vmatprep.subr.mxu0 0.0
    %700 = vmatpush1.msra.mxu0 %v589
    %701 = vmatprep.subr.mxu0 0.0
    %702 = vmatpush1.msra.mxu0 %v590
    %703 = vmatprep.subr.mxu0 0.0
    %704 = vmatpush1.msra.mxu0 %v591
    %705 = vmatprep.subr.mxu0 0.0
    %706 = vmatpush1.msra.mxu0 %v592
    %707 = vmatprep.subr.mxu0 0.0
    %708 = vmatpush1.msra.mxu0 %v593
    %709 = vmatprep.subr.mxu0 0.0
    %710 = vmatpush1.msra.mxu0 %v594
    %711 = vmatprep.subr.mxu0 0.0
    %712 = vmatpush1.msra.mxu0 %v595
    %713 = vmatprep.subr.mxu0 0.0
    %714 = vmatpush1.msra.mxu0 0.0
    %715 = vmatprep.subr.mxu0 0.0
    %716 = vmatpush1.msra.mxu0 0.0
    %717 = vmatprep.subr.mxu0 0.0
    %718 = vmatpush1.msra.mxu0 0.0
    %719 = vmatprep.subr.mxu0 0.0
    %720 = vmatpush1.msra.mxu0 0.0
    %721 = vmatprep.subr.mxu0 0.0
    %722 = vmatpush1.msra.mxu0 0.0
    %723 = vmatprep.subr.mxu0 0.0
    %724 = vmatpush1.msra.mxu0 0.0
    %725 = vmatprep.subr.mxu0 0.0
    %726 = vmatpush1.msra.mxu0 0.0
    %727 = vmatprep.subr.mxu0 0.0
    %728 = vmatpush1.msra.mxu0 0.0
    %729 = vmatprep.subr.mxu0 0.0
    %730 = vmatpush1.msra.mxu0 0.0
    %731 = vmatprep.subr.mxu0 0.0
    %732 = vmatpush1.msra.mxu0 0.0
    %733 = vmatprep.subr.mxu0 0.0
    %734 = vmatpush1.msra.mxu0 0.0
    %735 = vmatprep.subr.mxu0 0.0
    %736 = vmatpush1.msra.mxu0 0.0
    %737 = vmatprep.subr.mxu0 0.0
    %738 = vmatpush1.msra.mxu0 0.0
    %739 = vmatprep.subr.mxu0 0.0
    %740 = vmatpush1.msra.mxu0 0.0
    %741 = vmatprep.subr.mxu0 0.0
    %742 = vmatpush1.msra.mxu0 0.0
    %743 = vmatprep.subr.mxu0 0.0
    %744 = vmatpush1.msra.mxu0 0.0
    %745 = vmatprep.mubr.f32.mxu0 0.0
    %746 = vmatmul.mubr.f32.gmra.mrb[0].mxu0 %v544
    %v747 = vpop.f32.mrb[0].mxu0
    %v748 = vadd.f32 %v663, %v747
    %v749 = vpop.f32.mrb[0].mxu0
    %750 = vmatprep.mubr.f32.mxu0 0.0
    %751 = vmatmul.mubr.f32.gmra.mrb[0].mxu0 %v545
    %v752 = vpop.f32.mrb[0].mxu0
    %v753 = vadd.f32 %v668, %v752
    %v754 = vpop.f32.mrb[0].mxu0
    %755 = vmatprep.mubr.f32.mxu0 0.0
    %756 = vmatmul.mubr.f32.gmra.mrb[0].mxu0 %v546
    %v757 = vpop.f32.mrb[0].mxu0
    %v758 = vadd.f32 %v673, %v757
    %v759 = vpop.f32.mrb[0].mxu0
    %760 = vmatprep.mubr.f32.mxu0 0.0
    %761 = vmatmul.mubr.f32.gmra.mrb[0].mxu0 %v547
    %v762 = vpop.f32.mrb[0].mxu0
    %v763 = vadd.f32 %v678, %v762
    %v764 = vpop.f32.mrb[0].mxu0
    %765 = vdwg.mxu0
    %v766 = vld [vmem:[#allocation11] sm:$0x1]
    %v767 = vld [vmem:[#allocation13] sm:$0x1]
    %v768 = vadd.f32 %v748, %v753
    %v769 = vadd.f32 %v768, %v758
    %v770 = vadd.f32 %v769, %v763
    %v771 = vrot.slane %v770, 4
    %v772 = vadd.f32 %v770, %v771
    %v773 = vrot.slane %v772, 2
    %v774 = vadd.f32 %v772, %v773
    %v775 = vrot.slane %v774, 1
    %v776 = vadd.f32 %v774, %v775
    %777 = vrot.lane.b32.xlu0 %v776, 8
    %v778 = vpop.permute.xlu0 %777
    %v779 = vadd.f32 %v776, %v778
    %780 = vrot.lane.b32.xlu0 %v779, 16
    %v781 = vpop.permute.xlu0 %780
    %v782 = vadd.f32 %v779, %v781
    %783 = vrot.lane.b32.xlu0 %v782, 32
    %v784 = vpop.permute.xlu0 %783
    %v785 = vadd.f32 %v782, %v784
    %786 = vrot.lane.b32.xlu0 %v785, 64
    %v787 = vpop.permute.xlu0 %786
    %v788 = vadd.f32 %v785, %v787
    %v789 = vmul.f32 %v788, 0.001953125
    %v790 = vlaneseq
    %v791 = vshrl.u32 %v790, 7
    %v792 = vsub.s32 0, %v791
    %v793 = vrot.slane %v789, %v792
    %v794 = vsub.f32 %v748, %v793
    %v795 = vsub.f32 %v753, %v793
    %v796 = vsub.f32 %v758, %v793
    %v797 = vsub.f32 %v763, %v793
    %v798 = vmul.f32 %v794, %v794
    %v799 = vmul.f32 %v795, %v795
    %v800 = vmul.f32 %v796, %v796
    %v801 = vmul.f32 %v797, %v797
    %v802 = vadd.f32 %v798, %v799
    %v803 = vadd.f32 %v802, %v800
    %v804 = vadd.f32 %v803, %v801
    %v805 = vrot.slane %v804, 4
    %v806 = vadd.f32 %v804, %v805
    %v807 = vrot.slane %v806, 2
    %v808 = vadd.f32 %v806, %v807
    %v809 = vrot.slane %v808, 1
    %v810 = vadd.f32 %v808, %v809
    %811 = vrot.lane.b32.xlu0 %v810, 8
    %v812 = vpop.permute.xlu0 %811
    %v813 = vadd.f32 %v810, %v812
    %814 = vrot.lane.b32.xlu0 %v813, 16
    %v815 = vpop.permute.xlu0 %814
    %v816 = vadd.f32 %v813, %v815
    %817 = vrot.lane.b32.xlu0 %v816, 32
    %v818 = vpop.permute.xlu0 %817
    %v819 = vadd.f32 %v816, %v818
    %820 = vrot.lane.b32.xlu0 %v819, 64
    %v821 = vpop.permute.xlu0 %820
    %v822 = vadd.f32 %v819, %v821
    %v823 = vmul.f32 %v822, 0.001953125
    %v824 = vadd.f32 %v823, 1e-05
    %v825 = vrsqrt.pop %v824
    %v826 = vmul.f32 %v766, %v825
    %v828 = vlaneseq
    %v829 = vshrl.u32 %v828, 7
    %v830 = vsub.s32 0, %v829
    %v831 = vrot.slane %v826, %v830
    %v833 = vmul.f32 %v794, %v831
    %v834 = vmul.f32 %v795, %v831
    %v835 = vmul.f32 %v796, %v831
    %v836 = vmul.f32 %v797, %v831
    %v838 = vlaneseq
    %v839 = vshrl.u32 %v838, 7
    %v840 = vsub.s32 0, %v839
    %v841 = vrot.slane %v767, %v840
    %v843 = vadd.f32 %v833, %v841
    %v844 = vadd.f32 %v834, %v841
    %v845 = vadd.f32 %v835, %v841
    %v846 = vadd.f32 %v836, %v841
    %v847 = vadd.f32 %v843, %v114
    %v848 = vadd.f32 %v844, %v115
    %v849 = vadd.f32 %v845, %v116
    %v850 = vadd.f32 %v846, %v117
    %v851 = vmax.f32 %v847, 0.0
    %v852 = vmax.f32 %v848, 0.0
    %v853 = vmax.f32 %v849, 0.0
    %v854 = vmax.f32 %v850, 0.0
    %855 = vst [vmem:[#allocation14] sm:$0xff] %v851
    %856 = vst [vmem:[#allocation14 + $0x8] sm:$0xff] %v852
    %857 = vst [vmem:[#allocation14 + $0x10] sm:$0xff] %v853
    %858 = vst [vmem:[#allocation14 + $0x18] sm:$0xff] %v854
    // Predicated region
    $region58: #{basic_block.1} parent=1 // pred_check
      _
    $region59: #{basic_block.1} parent=1 // pred_check_branch
      %860 = sbr.rel (0) target = $region61
    $region60: #{basic_block.1} parent=1 // pred_region
      %s862 = ssub.s32 512, 512
      %863 = vsyncadd [#allocation4], %s862
      %s864 = sshll.u32 [#allocation14], 4
      %s865 = int_to_ptr.vmem [resolvable:$true] %s864
      %870 = dma.vmem_to_hbm [thread:$0]  %s865, 512, %s7, [#allocation4], 128, 128, 8
    $region61: #{basic_block.1} parent=1 // pred_fallthru
      _
    // Predicated region
    $region62: #{basic_block.1} parent=1 // pred_check
      _
    $region63: #{basic_block.1} parent=1 // pred_check_branch
      %872 = sbr.rel (0) target = $region65
    $region64: #{basic_block.1} parent=1 // pred_region
      %873 = dma.done [#allocation4], 512
    $region65: #{basic_block.1} parent=1 // pred_fallthru
      _
    %874 = vsyncpa [#allocation3], 1
    %875 = vsyncpa [#allocation6], 1
    %876 = vsyncpa [#allocation9], 1
    %877 = vsyncpa [#allocation12], 1
    %878 = vsyncpa [#allocation4], 1

</llo_original>
